<compile_context>
chip_gen: v7x
topology: tpu7x:2x2x1
jax: 0.10.0
libtpu: 0.0.40
codegen_flags: <defaults>
</compile_context>

<pallas_src>
import jax
import jax.numpy as jnp
from jax.experimental import pallas as pl
from jax.experimental.pallas import tpu as pltpu


def _round_up(v, m):
    return ((v + m - 1) // m) * m


def _kernel_vmem_bytes(tm, k, e_pad, out_bytes):
    # Double-buffered streaming blocks + (conservatively double-buffered) resident blocks.
    patches = 2 * tm * k * 2           # bf16 patch tile
    out = 2 * tm * e_pad * out_bytes   # output tile
    weight = 2 * k * e_pad * 2         # bf16 weight (constant block)
    bias = 2 * 8 * e_pad * 4           # f32 bias, sublane-padded
    return patches + out + weight + bias


def _patch_embed_kernel(p_ref, w_ref, b_ref, o_ref):
    # p_ref: (TM, K) bf16 patch rows; w_ref: (K, E_pad) bf16, VMEM-resident;
    # b_ref: (1, E_pad) f32; o_ref: (TM, E_pad) out dtype.
    # MXU matmul with f32 accumulation, bias added in f32, cast in epilogue only.
    acc = jnp.dot(p_ref[...], w_ref[...], preferred_element_type=jnp.float32)
    o_ref[...] = (acc + b_ref[...]).astype(o_ref.dtype)


def patch_embedding(x, weight, bias, patch_size, out_dtype=jnp.bfloat16):
    """x: (B, C, H, W); weight: (E, C, P, P); bias: (E,).

    Returns (B, (H//P)*(W//P), E) in `out_dtype`, matching PyTorch's
    x = conv(x); x = x.flatten(2).transpose(1, 2)   (compute in f32 accumulation).
    """
    B, C, H, W = x.shape
    P = patch_size
    E = weight.shape[0]
    Hp, Wp = H // P, W // P
    M = B * Hp * Wp
    K = C * P * P

    out_bytes = jnp.dtype(out_dtype).itemsize

    # ---- tile sizes -----------------------------------------------------------
    # E padded to a lane multiple so output stores are full unmasked lane-dense vst.
    # (Standard ViT widths 768/1024/1280 make this a no-op and are 256-multiples,
    #  i.e. full MXU N-width on v6e/v7x.)
    E_pad = _round_up(E, 128)
    # K is deliberately NOT padded: it is the full array dim of both GEMM operands,
    # which satisfies the (8,128) block rule without an extra full-array pad pass.
    M_r = _round_up(M, 16)                       # bf16 sublane packing on M
    TM = min(1024, M_r)
    vmem_budget = 40 * 1024 * 1024               # safe on v5e/v6e/v7x scoped VMEM
    while TM > 16 and _kernel_vmem_bytes(TM, K, E_pad, out_bytes) > vmem_budget:
        TM //= 2
    M_pad = _round_up(M, TM)                     # usually == M at ViT scale

    # ---- layout glue: non-overlapping patches in (c, kh, kw) column order ------
    patches = x.astype(jnp.bfloat16).reshape(B, C, Hp, P, Wp, P)
    patches = patches.transpose(0, 2, 4, 1, 3, 5).reshape(M, K)   # rows in (b,hp,wp)
    if M_pad > M:
        patches = jnp.pad(patches, ((0, M_pad - M), (0, 0)))

    # Conv weight (E, C, P, P) -> GEMM weight (K, E) in matching (c,kh,kw) order.
    w_mat = weight.reshape(E, K).T.astype(jnp.bfloat16)           # (K, E), tiny
    if E_pad > E:
        w_mat = jnp.pad(w_mat, ((0, 0), (0, E_pad - E)))
        b_vec = jnp.pad(bias.astype(jnp.float32), (0, E_pad - E))
    else:
        b_vec = bias.astype(jnp.float32)
    b_mat = b_vec.reshape(1, E_pad)

    grid = (M_pad // TM,)
    working_set = _kernel_vmem_bytes(TM, K, E_pad, out_bytes)
    vmem_limit = int(min(max(2 * working_set, 16 * 1024 * 1024), 48 * 1024 * 1024))

    out = pl.pallas_call(
        _patch_embed_kernel,
        out_shape=jax.ShapeDtypeStruct((M_pad, E_pad), out_dtype),
        grid_spec=pltpu.PrefetchScalarGridSpec(
            num_scalar_prefetch=0,
            grid=grid,
            in_specs=[
                pl.BlockSpec((TM, K), lambda i: (i, 0)),       # streaming patch rows
                pl.BlockSpec((K, E_pad), lambda i: (0, 0)),    # whole weight, resident
                pl.BlockSpec((1, E_pad), lambda i: (0, 0)),    # bias, resident
            ],
            out_specs=pl.BlockSpec((TM, E_pad), lambda i: (i, 0)),
        ),
        compiler_params=pltpu.CompilerParams(
            dimension_semantics=("parallel",),                 # long M axis -> 2 TCs on v7x
            vmem_limit_bytes=vmem_limit,
        ),
        cost_estimate=pl.CostEstimate(
            flops=2 * M_pad * K * E_pad,
            transcendentals=0,
            bytes_accessed=(M_pad * K * 2          # patches (bf16), read once
                            + K * E_pad * 2        # weight (bf16), read once (resident)
                            + E_pad * 4            # bias
                            + M_pad * E_pad * out_bytes),  # output
        ),
    )(patches, w_mat, b_mat)

    if M_pad > M or E_pad > E:
        out = out[:M, :E]
    return out.reshape(B, Hp * Wp, E)


if __name__ == "__main__":
    # Small shapes consistent with the module: B=2, C=4, H=W=16, P=4, embed_dim=32.
    B, C, H, W = 2, 4, 16, 16
    patch_size = 4
    embed_dim = 32

    key = jax.random.PRNGKey(0)
    kx, kw, kb = jax.random.split(key, 3)
    x = jax.random.normal(kx, (B, C, H, W), dtype=jnp.float32)
    weight = jax.random.normal(
        kw, (embed_dim, C, patch_size, patch_size), dtype=jnp.float32) * 0.02
    bias = jax.random.normal(kb, (embed_dim,), dtype=jnp.float32) * 0.02

    out = jax.block_until_ready(patch_embedding(x, weight, bias, patch_size))

    # Reference: XLA conv with the same bf16 rounding of operands, f32 compute.
    x_q = x.astype(jnp.bfloat16).astype(jnp.float32)
    w_q = weight.astype(jnp.bfloat16).astype(jnp.float32)
    ref = jax.lax.conv_general_dilated(
        x_q, w_q, window_strides=(patch_size, patch_size), padding="VALID",
        dimension_numbers=("NCHW", "OIHW", "NCHW"),
        precision=jax.lax.Precision.HIGHEST)
    ref = ref + bias.reshape(1, embed_dim, 1, 1)
    ref = ref.reshape(B, embed_dim, -1).transpose(0, 2, 1)   # flatten(2).transpose(1,2)

    assert out.shape == (B, (H // patch_size) * (W // patch_size), embed_dim)
    assert out.dtype == jnp.bfloat16
    # Output is bf16 (perf-review item): compare with bf16-level tolerance.
    assert jnp.allclose(out.astype(jnp.float32), ref, atol=1e-2, rtol=2e-2)
    print("KERNEL_OK")
</pallas_src>

<mosaic_0001>
module attributes {stable_mosaic.version = 11 : i64} {
  func.func @_patch_embed_kernel(%arg0: i32, %arg1: memref<32x64xbf16, #tpu.memory_space<vmem>>, %arg2: memref<64x128xbf16, #tpu.memory_space<vmem>>, %arg3: memref<1x128xf32, #tpu.memory_space<vmem>>, %arg4: memref<32x128xbf16, #tpu.memory_space<vmem>>) attributes {dimension_semantics = [#tpu.dimension_semantics<parallel>], iteration_bounds = array<i64: 1>, scalar_prefetch = 0 : i64, scratch_operands = 0 : i64, tpu.core_type = #tpu.core_type<tc>, window_params = [{transform_indices = @transform_0, window_bounds = array<i64: 32, 64>}, {pipeline_mode = #tpu.pipeline_mode<synchronous>, transform_indices = @transform_1, window_bounds = array<i64: 64, 128>}, {pipeline_mode = #tpu.pipeline_mode<synchronous>, transform_indices = @transform_2, window_bounds = array<i64: 1, 128>}, {transform_indices = @transform_3, window_bounds = array<i64: 32, 128>}]} {
    %c0 = arith.constant 0 : index
    %c0_0 = arith.constant 0 : index
    %0 = vector.load %arg1[%c0, %c0_0] : memref<32x64xbf16, #tpu.memory_space<vmem>>, vector<32x64xbf16>
    %c0_1 = arith.constant 0 : index
    %c0_2 = arith.constant 0 : index
    %1 = vector.load %arg2[%c0_1, %c0_2] : memref<64x128xbf16, #tpu.memory_space<vmem>>, vector<64x128xbf16>
    %cst = arith.constant dense<0.000000e+00> : vector<32x128xf32>
    %2 = tpu.matmul %0, %1, %cst {dimension_numbers = #tpu.dot_dimension_numbers<[1], [0], [0], [1], [0, 0, 1, 1], [], []>} : vector<32x64xbf16>, vector<64x128xbf16>, vector<32x128xf32> -> vector<32x128xf32>
    %c0_3 = arith.constant 0 : index
    %c0_4 = arith.constant 0 : index
    %3 = vector.load %arg3[%c0_3, %c0_4] : memref<1x128xf32, #tpu.memory_space<vmem>>, vector<1x128xf32>
    %4 = vector.broadcast %3 : vector<1x128xf32> to vector<32x128xf32>
    %5 = arith.addf %2, %4 : vector<32x128xf32>
    %6 = arith.truncf %5 : vector<32x128xf32> to vector<32x128xbf16>
    %c0_5 = arith.constant 0 : index
    %c0_6 = arith.constant 0 : index
    %7 = vector.load %arg4[%c0_5, %c0_6] : memref<32x128xbf16, #tpu.memory_space<vmem>>, vector<32x128xbf16>
    tpu.vector_store %arg4[%c0_5, %c0_6], %6 {strides = array<i32>} : memref<32x128xbf16, #tpu.memory_space<vmem>>, vector<32x128xbf16>,
    return
  }
  func.func @transform_0(%arg0: i32) -> (i32, i32) {
    %c0_i32 = arith.constant 0 : i32
    %c0_i32_0 = arith.constant 0 : i32
    return %arg0, %c0_i32 : i32, i32
  }
  func.func @transform_1(%arg0: i32) -> (i32, i32) {
    %c0_i32 = arith.constant 0 : i32
    %c0_i32_0 = arith.constant 0 : i32
    %c0_i32_1 = arith.constant 0 : i32
    return %c0_i32, %c0_i32_0 : i32, i32
  }
  func.func @transform_2(%arg0: i32) -> (i32, i32) {
    %c0_i32 = arith.constant 0 : i32
    %c0_i32_0 = arith.constant 0 : i32
    %c0_i32_1 = arith.constant 0 : i32
    return %c0_i32, %c0_i32_0 : i32, i32
  }
  func.func @transform_3(%arg0: i32) -> (i32, i32) {
    %c0_i32 = arith.constant 0 : i32
    %c0_i32_0 = arith.constant 0 : i32
    return %arg0, %c0_i32 : i32, i32
  }
}

</mosaic_0001>

<llo_original>
// kernel: tpu_custom_call.1
$region0: #{tpu_custom_call.1}
  #allocation0 [shape = 'u32[]', space=smem, size = 0x4, offset = 0x4, fixed_abs, tag = 'smem constant byte address 0x4 - core index']
  #allocation1 [shape = 'u32[144,128]{1,0:T(1,128)}', space=vmem, size = 0x12000, scoped, tag = 'internal scratch']
  %s0 = inlined_call_operand.hbm [shape: bf16[32,64], index: 0, kind: input, shape index: {}]
  %s1 = inlined_call_operand.hbm [shape: bf16[64,128], index: 1, kind: input, shape index: {}]
  %s2 = inlined_call_operand.vmem [shape: f32[1,128], index: 2, kind: input, shape index: {}]
  %s3 = inlined_call_operand.hbm [shape: bf16[32,128], index: 3, kind: output, shape index: {}]
  %s4 = sld [smem:[#allocation0]]
  $region30: #{tpu_custom_call.1} parent=0
    _
  %s6 = ssub.s32 1, %s4
  %s7 = scalar_select 0, %s6, %s4
  $region1: #{tpu_custom_call.1} parent=0
    #allocation2 [shape = 'u8[8192]{0}', space=vmem, size = 0x2000, scoped, tag = 'input window, operand 0, single buffered']
    #allocation3 [shape = 's32[1]{0}', space=sflag, size = 0x4, scoped, tag = 'scoped memory for tpu_custom_call.1']
    #allocation4 [shape = 's32[1]{0}', space=sflag, size = 0x4, scoped, tag = 'scoped memory for tpu_custom_call.1']
    #allocation5 [shape = 'u8[16384]{0}', space=vmem, size = 0x4000, scoped, tag = 'input window, operand 1, single buffered']
    #allocation6 [shape = 's32[1]{0}', space=sflag, size = 0x4, scoped, tag = 'scoped memory for tpu_custom_call.1']
    #allocation7 [shape = 'u8[8192]{0}', space=vmem, size = 0x2000, scoped, tag = 'output window, operand 0, single buffered']
    %8 = vsyncpa [#allocation3], 0
    %9 = vsyncpa [#allocation6], 0
    %10 = vsyncpa [#allocation4], 0
    // Predicated region
    $region2: #{tpu_custom_call.1} parent=1 // pred_check
      _
    $region3: #{tpu_custom_call.1} parent=1 // pred_check_branch
      %12 = sbr.rel (0) target = $region5
    $region4: #{tpu_custom_call.1} parent=1 // pred_region
      %s14 = ssub.s32 256, 256
      %15 = vsyncadd [#allocation3], %s14
      %s16 = sshll.u32 [#allocation2], 4
      %s17 = int_to_ptr.vmem [resolvable:$true] %s16
      %22 = dma.hbm_to_vmem [thread:$0]  %s0, 256, %s17, [#allocation3], 64, 64, 4
    $region5: #{tpu_custom_call.1} parent=1 // pred_fallthru
      _
    // Predicated region
    $region6: #{tpu_custom_call.1} parent=1 // pred_check
      _
    $region7: #{tpu_custom_call.1} parent=1 // pred_check_branch
      %24 = sbr.rel (0) target = $region9
    $region8: #{tpu_custom_call.1} parent=1 // pred_region
      %s26 = ssub.s32 512, 512
      %27 = vsyncadd [#allocation6], %s26
      %s28 = sshll.u32 [#allocation5], 4
      %s29 = int_to_ptr.vmem [resolvable:$true] %s28
      %34 = dma.hbm_to_vmem [thread:$0]  %s1, 512, %s29, [#allocation6], 64, 64, 4
    $region9: #{tpu_custom_call.1} parent=1 // pred_fallthru
      _
    // Predicated region
    $region10: #{tpu_custom_call.1} parent=1 // pred_check
      _
    $region11: #{tpu_custom_call.1} parent=1 // pred_check_branch
      %36 = sbr.rel (0) target = $region13
    $region12: #{tpu_custom_call.1} parent=1 // pred_region
      _
    $region13: #{tpu_custom_call.1} parent=1 // pred_fallthru
      _
    // Predicated region
    $region14: #{tpu_custom_call.1} parent=1 // pred_check
      _
    $region15: #{tpu_custom_call.1} parent=1 // pred_check_branch
      %38 = sbr.rel (0) target = $region17
    $region16: #{tpu_custom_call.1} parent=1 // pred_region
      %39 = dma.done [#allocation3], 256
    $region17: #{tpu_custom_call.1} parent=1 // pred_fallthru
      _
    // Predicated region
    $region18: #{tpu_custom_call.1} parent=1 // pred_check
      _
    $region19: #{tpu_custom_call.1} parent=1 // pred_check_branch
      %41 = sbr.rel (0) target = $region21
    $region20: #{tpu_custom_call.1} parent=1 // pred_region
      %42 = dma.done [#allocation6], 512
    $region21: #{tpu_custom_call.1} parent=1 // pred_fallthru
      _
    %v44 = vld [vmem:[#allocation2] sm:$0xf]
    %v45 = vld [vmem:[#allocation2 + $0x4] sm:$0xf]
    %v46 = vld [vmem:[#allocation2 + $0x8] sm:$0xf]
    %v47 = vld [vmem:[#allocation2 + $0xc] sm:$0xf]
    %v48 = vld [vmem:[#allocation5] sm:$0xf]
    %v49 = vld [vmem:[#allocation5 + $0x4] sm:$0xf]
    %v50 = vld [vmem:[#allocation5 + $0x8] sm:$0xf]
    %v51 = vld [vmem:[#allocation5 + $0xc] sm:$0xf]
    %v52 = vld [vmem:[#allocation5 + $0x10] sm:$0xf]
    %v53 = vld [vmem:[#allocation5 + $0x14] sm:$0xf]
    %v54 = vld [vmem:[#allocation5 + $0x18] sm:$0xf]
    %v55 = vld [vmem:[#allocation5 + $0x1c] sm:$0xf]
    %v56 = vld [vmem:[%s2] sm:$0x1]
    %v58 = vlaneseq
    %v59 = vshrl.u32 %v58, 7
    %v60 = vsub.s32 0, %v59
    %v61 = vrot.slane %v56, %v60
    %v67 = vunpack.c.l.b16 %v44
    %v68 = vunpack.c.l.b16 %v45
    %v69 = vunpack.c.l.b16 %v46
    %v70 = vunpack.c.l.b16 %v47
    %v71 = vpack.c.b16 %v68, %v67
    %v72 = vpack.c.b16 %v70, %v69
    %v81 = vunpack.c.l.b16 %v48
    %v82 = vunpack.c.l.b16 %v49
    %v83 = vunpack.c.l.b16 %v50
    %v84 = vunpack.c.l.b16 %v51
    %v85 = vunpack.c.l.b16 %v52
    %v86 = vunpack.c.l.b16 %v53
    %v87 = vunpack.c.l.b16 %v54
    %v88 = vunpack.c.l.b16 %v55
    %v89 = vpack.c.b16 %v82, %v81
    %v90 = vpack.c.b16 %v84, %v83
    %v91 = vpack.c.b16 %v86, %v85
    %v92 = vpack.c.b16 %v88, %v87
    %vm97 = vcmask 523264
    %v99 = vsel %vm97, %v71, 0
    %v102 = vsel %vm97, %v72, 0
    %104 = vmatprep.subr.bf16.mxu0 0
    %105 = vmatpush1.bf16.msra.mxu0 %v89
    %106 = vmatprep.subr.bf16.mxu0 0
    %107 = vmatpush1.bf16.msra.mxu0 %v90
    %108 = vmatprep.subr.bf16.mxu0 0
    %109 = vmatpush1.bf16.msra.mxu0 %v91
    %110 = vmatprep.subr.bf16.mxu0 0
    %111 = vmatpush1.bf16.msra.mxu0 %v92
    %112 = vmatprep.subr.bf16.mxu0 0
    %113 = vmatpush1.bf16.msra.mxu0 0
    %114 = vmatprep.subr.bf16.mxu0 0
    %115 = vmatpush1.bf16.msra.mxu0 0
    %116 = vmatprep.subr.bf16.mxu0 0
    %117 = vmatpush1.bf16.msra.mxu0 0
    %118 = vmatprep.subr.bf16.mxu0 0
    %119 = vmatpush1.bf16.msra.mxu0 0
    %120 = vmatprep.subr.bf16.mxu0 0
    %121 = vmatpush1.bf16.msra.mxu0 0
    %122 = vmatprep.subr.bf16.mxu0 0
    %123 = vmatpush1.bf16.msra.mxu0 0
    %124 = vmatprep.subr.bf16.mxu0 0
    %125 = vmatpush1.bf16.msra.mxu0 0
    %126 = vmatprep.subr.bf16.mxu0 0
    %127 = vmatpush1.bf16.msra.mxu0 0
    %128 = vmatprep.subr.bf16.mxu0 0
    %129 = vmatpush1.bf16.msra.mxu0 0
    %130 = vmatprep.subr.bf16.mxu0 0
    %131 = vmatpush1.bf16.msra.mxu0 0
    %132 = vmatprep.subr.bf16.mxu0 0
    %133 = vmatpush1.bf16.msra.mxu0 0
    %134 = vmatprep.subr.bf16.mxu0 0
    %135 = vmatpush1.bf16.msra.mxu0 0
    %136 = vmatprep.mubr.bf16.mxu0 0
    %137 = vmatmul.mubr.bf16.gmra.mrb[0].mxu0 %v99
    %v138 = vpop.f32.mrb[0].mxu0
    %v139 = vadd.f32 %v61, %v138
    %v140 = vpop.f32.mrb[0].mxu0
    %v141 = vpop.f32.mrb[0].mxu0
    %v142 = vadd.f32 %v61, %v141
    %v143 = vpop.f32.mrb[0].mxu0
    %144 = vmatprep.mubr.bf16.mxu0 0
    %145 = vmatmul.mubr.bf16.gmra.mrb[0].mxu0 %v102
    %v146 = vpop.f32.mrb[0].mxu0
    %v147 = vadd.f32 %v61, %v146
    %v148 = vpop.f32.mrb[0].mxu0
    %v149 = vpop.f32.mrb[0].mxu0
    %v150 = vadd.f32 %v61, %v149
    %v151 = vpop.f32.mrb[0].mxu0
    %152 = vdwg.mxu0
    %v153 = vpack.c.bf16 %v142, %v139
    %v154 = vpack.c.bf16 %v150, %v147
    %v157 = vunpack.c.l.b16 %v153
    %v158 = vunpack.c.h.b16 %v153
    %v159 = vunpack.c.l.b16 %v154
    %v160 = vunpack.c.h.b16 %v154
    %v161 = vpack.c.b16 %v157, %v157
    %v162 = vpack.c.b16 %v158, %v158
    %v163 = vpack.c.b16 %v159, %v159
    %v164 = vpack.c.b16 %v160, %v160
    %169 = vst [vmem:[#allocation7] sm:$0xf] %v161
    %170 = vst [vmem:[#allocation7 + $0x4] sm:$0xf] %v162
    %171 = vst [vmem:[#allocation7 + $0x8] sm:$0xf] %v163
    %172 = vst [vmem:[#allocation7 + $0xc] sm:$0xf] %v164
    // Predicated region
    $region22: #{tpu_custom_call.1} parent=1 // pred_check
      _
    $region23: #{tpu_custom_call.1} parent=1 // pred_check_branch
      %174 = sbr.rel (0) target = $region25
    $region24: #{tpu_custom_call.1} parent=1 // pred_region
      %s176 = ssub.s32 256, 256
      %177 = vsyncadd [#allocation4], %s176
      %s178 = sshll.u32 [#allocation7], 4
      %s179 = int_to_ptr.vmem [resolvable:$true] %s178
      %184 = dma.vmem_to_hbm [thread:$0]  %s179, 256, %s3, [#allocation4], 64, 64, 4
    $region25: #{tpu_custom_call.1} parent=1 // pred_fallthru
      _
    // Predicated region
    $region26: #{tpu_custom_call.1} parent=1 // pred_check
      _
    $region27: #{tpu_custom_call.1} parent=1 // pred_check_branch
      %186 = sbr.rel (0) target = $region29
    $region28: #{tpu_custom_call.1} parent=1 // pred_region
      %187 = dma.done [#allocation4], 256
    $region29: #{tpu_custom_call.1} parent=1 // pred_fallthru
      _
    %188 = vsyncpa [#allocation3], 1
    %189 = vsyncpa [#allocation6], 1
    %190 = vsyncpa [#allocation4], 1

</llo_original>
